<compile_context>
chip_gen: v7x
topology: tpu7x:2x2x1
jax: 0.10.0
libtpu: 0.0.40
codegen_flags: <defaults>
</compile_context>

<pallas_src>
import jax
import jax.numpy as jnp
from jax.experimental import pallas as pl
from jax.experimental.pallas import tpu as pltpu


_VMEM_LIMIT_BYTES = 32 * 1024 * 1024   # explicit; safe on v5e/v6e (128 MiB) and v7x (64 MiB)


def _device_tuning():
    """Return (max_tile_bytes, min_grid_steps_for_large_inputs) for the local TPU."""
    try:
        kind = jax.devices()[0].device_kind.lower()
    except Exception:
        kind = ""
    if "7" in kind:
        # v7x: ~3.2 TB/s HBM per TC -> 4 MiB tiles amortize per-step overhead;
        # 2 TensorCores -> want >= 2 "parallel" grid steps for non-tiny inputs.
        return 4 * 1024 * 1024, 2
    # v5e/v6e: 2 MiB tiles already make the ~0.35 us/step overhead <10% and keep
    # 2 arrays x 2 pipeline buffers within v5e's 16 MiB scoped-VMEM default.
    return 2 * 1024 * 1024, 1


def _scale_kernel(s_ref, x_ref, o_ref):
    # s_ref: (1,) f32 scalar in SMEM; x_ref / o_ref: (block_rows, cols) VMEM tiles.
    s = s_ref[0].astype(x_ref.dtype)      # single SMEM read, multiply in tile dtype
    o_ref[...] = x_ref[...] * s


@jax.jit
def scale_forward(x: jax.Array, scale: jax.Array) -> jax.Array:
    """out = x * scale, where scale is a 1-element learnable parameter (any x shape)."""
    orig_shape = x.shape
    dtype = x.dtype
    total = x.size
    elem_bytes = jnp.dtype(dtype).itemsize

    # Largest lane-dense width (multiple of 128) that makes the 2D reshape copy-free.
    cols = next((c for c in (512, 256, 128) if total % c == 0), None)
    if cols is None or total == 0:
        # Ragged totals: a whole-tensor XLA multiply is already bandwidth-optimal
        # (1 read + 1 write); splitting off a <128-element tail would add copies.
        return x * scale[0].astype(dtype)

    rows = total // cols
    max_tile_bytes, min_steps_large = _device_tuning()
    max_block_rows = max(8, (max_tile_bytes // (cols * elem_bytes)) // 8 * 8)

    total_bytes = total * elem_bytes
    min_steps = min_steps_large if total_bytes > 2 * 1024 * 1024 else 1

    if rows <= max_block_rows and min_steps == 1:
        block_rows, grid_rows = rows, 1              # single step, block == full array
    else:
        steps = max(pl.cdiv(rows, max_block_rows), min_steps)
        block_rows = max(8, pl.cdiv(pl.cdiv(rows, steps), 8) * 8)
        grid_rows = pl.cdiv(rows, block_rows)        # ragged last block masked by Pallas

    x2d = x.reshape(rows, cols)                      # copy-free, lane-dense view

    out2d = pl.pallas_call(
        _scale_kernel,
        out_shape=jax.ShapeDtypeStruct((rows, cols), dtype),
        grid=(grid_rows,),
        in_specs=[
            pl.BlockSpec(memory_space=pltpu.SMEM),               # (1,) scalar parameter
            pl.BlockSpec((block_rows, cols), lambda r: (r, 0)),  # lane-dense tile
        ],
        out_specs=pl.BlockSpec((block_rows, cols), lambda r: (r, 0)),
        compiler_params=pltpu.CompilerParams(
            dimension_semantics=("parallel",),       # shards across both TCs on v7x
            vmem_limit_bytes=_VMEM_LIMIT_BYTES,
        ),
    )(scale.astype(jnp.float32), x2d)

    return out2d.reshape(orig_shape)


if __name__ == "__main__":
    key = jax.random.PRNGKey(0)
    k1, k2, k3, k4 = jax.random.split(key, 4)

    # Parameter init matching nn.Parameter(torch.FloatTensor([1.0])).
    scale_default = jnp.array([1.0], dtype=jnp.float32)
    # A non-trivial "learned" value so the multiply is actually exercised.
    scale_learned = jnp.array([1.7], dtype=jnp.float32)

    # 1) Small FCOS-head-like shape (2048 elems -> copy-free (4, 512) slab, 1 step).
    x = jax.random.normal(k1, (2, 4, 16, 16), dtype=jnp.float32)
    out = jax.block_until_ready(scale_forward(x, scale_default))
    assert out.shape == x.shape and out.dtype == x.dtype
    assert jnp.allclose(out, x * scale_default[0], atol=1e-6)

    out_l = jax.block_until_ready(scale_forward(x, scale_learned))
    assert jnp.allclose(out_l, x * scale_learned[0], atol=1e-6)

    # 2) Divisible by 128 but not 256/512 (384 elems -> (3, 128) slab).
    x2 = jax.random.normal(k2, (1, 3, 8, 16), dtype=jnp.float32)
    out2 = jax.block_until_ready(scale_forward(x2, scale_learned))
    assert jnp.allclose(out2, x2 * scale_learned[0], atol=1e-6)

    # 3) Larger shape exercising the multi-step parallel grid with a ragged
    #    (Pallas-masked) last row-block: 1,572,864 elems -> (3072, 512).
    x3 = jax.random.normal(k3, (2, 8, 256, 384), dtype=jnp.float32)
    out3 = jax.block_until_ready(scale_forward(x3, scale_learned))
    assert jnp.allclose(out3, x3 * scale_learned[0], atol=1e-6)

    # 4) Total not divisible by 128 -> bandwidth-optimal XLA fallback path.
    x4 = jax.random.normal(k4, (2, 3, 7, 5), dtype=jnp.float32)
    out4 = jax.block_until_ready(scale_forward(x4, scale_learned))
    assert jnp.allclose(out4, x4 * scale_learned[0], atol=1e-6)

    print("KERNEL_OK")
</pallas_src>

<mosaic_0001>
module attributes {stable_mosaic.version = 11 : i64} {
  func.func @_scale_kernel(%arg0: i32, %arg1: memref<1xf32, #tpu.memory_space<smem>>, %arg2: memref<4x512xf32, #tpu.memory_space<vmem>>, %arg3: memref<4x512xf32, #tpu.memory_space<vmem>>) attributes {dimension_semantics = [#tpu.dimension_semantics<parallel>], iteration_bounds = array<i64: 1>, scalar_prefetch = 0 : i64, scratch_operands = 0 : i64, tpu.core_type = #tpu.core_type<tc>, window_params = [{transform_indices = @transform_0, window_bounds = array<i64: 1>}, {transform_indices = @transform_1, window_bounds = array<i64: 4, 512>}, {transform_indices = @transform_2, window_bounds = array<i64: 4, 512>}]} {
    %c0 = arith.constant 0 : index
    %0 = memref.load %arg1[%c0] : memref<1xf32, #tpu.memory_space<smem>>
    %c0_0 = arith.constant 0 : index
    %c0_1 = arith.constant 0 : index
    %1 = vector.load %arg2[%c0_0, %c0_1] : memref<4x512xf32, #tpu.memory_space<vmem>>, vector<4x512xf32>
    %2 = vector.broadcast %0 : f32 to vector<4x512xf32>
    %3 = arith.mulf %1, %2 : vector<4x512xf32>
    %c0_2 = arith.constant 0 : index
    %c0_3 = arith.constant 0 : index
    %4 = vector.load %arg3[%c0_2, %c0_3] : memref<4x512xf32, #tpu.memory_space<vmem>>, vector<4x512xf32>
    tpu.vector_store %arg3[%c0_2, %c0_3], %3 {strides = array<i32>} : memref<4x512xf32, #tpu.memory_space<vmem>>, vector<4x512xf32>,
    return
  }
  func.func @transform_0(%arg0: i32) -> i32 {
    %c0_i32 = arith.constant 0 : i32
    %c0_i32_0 = arith.constant 0 : i32
    return %c0_i32 : i32
  }
  func.func @transform_1(%arg0: i32) -> (i32, i32) {
    %c0_i32 = arith.constant 0 : i32
    %c0_i32_0 = arith.constant 0 : i32
    return %arg0, %c0_i32 : i32, i32
  }
  func.func @transform_2(%arg0: i32) -> (i32, i32) {
    %c0_i32 = arith.constant 0 : i32
    %c0_i32_0 = arith.constant 0 : i32
    return %arg0, %c0_i32 : i32, i32
  }
}

</mosaic_0001>

<llo_original>
// kernel: scale_forward.1
$region0: #{scale_forward.1}
  #allocation0 [shape = 'u32[]', space=smem, size = 0x4, offset = 0x4, fixed_abs, tag = 'smem constant byte address 0x4 - core index']
  #allocation1 [shape = 'u32[144,128]{1,0:T(1,128)}', space=vmem, size = 0x12000, scoped, tag = 'internal scratch']
  #allocation2 [shape = 'f32[1]{0:T(128)S(6)}', space=smem, size = 0x200, scoped, tag = 'scoped memory for scale_forward.1']
  %s0 = inlined_call_operand.<no memory space> [shape: f32[1], index: 0, kind: input, shape index: {}]
  %s1 = inlined_call_operand.vmem [shape: f32[4,512], index: 1, kind: input, shape index: {}]
  %s2 = inlined_call_operand.vmem [shape: f32[4,512], index: 2, kind: output, shape index: {}]
  %s3 = sld [smem:[#allocation0]]
  $region18: #{scale_forward.1} parent=0
    _
  %s5 = ssub.s32 1, %s3
  %s6 = scalar_select 0, %s5, %s3
  %7 = sst [smem:[#allocation2]] %s0
  // Predicated region
  $region2: #{scale_forward.1} parent=0 // pred_check
    _
  $region3: #{scale_forward.1} parent=0 // pred_check_branch
    %9 = sbr.rel (0) target = $region5
  $region4: #{scale_forward.1} parent=0 // pred_region
    _
  $region5: #{scale_forward.1} parent=0 // pred_fallthru
    _
  // Predicated region
  $region6: #{scale_forward.1} parent=0 // pred_check
    _
  $region7: #{scale_forward.1} parent=0 // pred_check_branch
    %11 = sbr.rel (0) target = $region9
  $region8: #{scale_forward.1} parent=0 // pred_region
    _
  $region9: #{scale_forward.1} parent=0 // pred_fallthru
    _
  %s12 = sld [smem:[#allocation2]]
  %v13 = vld [vmem:[%s1] sm:$0xff]
  %v14 = vld [vmem:[%s1 + $0x8] sm:$0xff]
  %v15 = vstv %s12
  %v16 = vmul.f32 %v13, %v15
  %v17 = vmul.f32 %v14, %v15
  %18 = vst [vmem:[%s2] sm:$0xff] %v16
  %19 = vst [vmem:[%s2 + $0x8] sm:$0xff] %v17
  // Predicated region
  $region10: #{scale_forward.1} parent=0 // pred_check
    _
  $region11: #{scale_forward.1} parent=0 // pred_check_branch
    %21 = sbr.rel (0) target = $region13
  $region12: #{scale_forward.1} parent=0 // pred_region
    _
  $region13: #{scale_forward.1} parent=0 // pred_fallthru
    _
  // Predicated region
  $region14: #{scale_forward.1} parent=0 // pred_check
    _
  $region15: #{scale_forward.1} parent=0 // pred_check_branch
    %23 = sbr.rel (0) target = $region17
  $region16: #{scale_forward.1} parent=0 // pred_region
    _
  $region17: #{scale_forward.1} parent=0 // pred_fallthru
    _

</llo_original>
